<compile_context>
chip_gen: v5e
topology: v5e:2x2
jax: 0.10.0
libtpu: 0.0.40
codegen_flags: <defaults>
</compile_context>

<pallas_src>
import numpy as np
import jax
import jax.numpy as jnp
from jax.experimental import pallas as pl
from jax.experimental.pallas import tpu as pltpu


_LANE = 128
_SUBLANE = 8
_FC_MAX_LANES = 64 * 1024           # 256 KiB (f32) per batch row per buffer
_TILE_ELEMS_TARGET = 512 * 1024     # ~2 MiB (f32) per big buffer per grid step
_PALLAS_MIN_ELEMS = 128 * 1024      # below this, plain XLA fusion wins


def _lens_kernel(er_ref, ei_ref, pr_ref, pi_ref, or_ref, oi_ref):
    er = er_ref[...]          # (TB, Fc)
    ei = ei_ref[...]          # (TB, Fc)
    pr = pr_ref[...]          # (1,  Fc) — broadcasts over the batch-tile rows
    pi = pi_ref[...]          # (1,  Fc)
    # Complex multiply E * phase; amplitude (== 1) is pre-folded into pr/pi.
    or_ref[...] = er * pr - ei * pi
    oi_ref[...] = er * pi + ei * pr


def _pick_tiles(B, F_pad):
    """Bounded (TB, Fc) tile: <= ~2 MiB per big buffer regardless of B, N."""
    Fc = min(F_pad, _FC_MAX_LANES)            # multiple of 128 (F_pad is)
    tb = max(_SUBLANE, _TILE_ELEMS_TARGET // Fc)
    if tb >= B:
        tb = B                                 # full-extent block along batch
    else:
        tb = max(_SUBLANE, (tb // _SUBLANE) * _SUBLANE)  # sublane-aligned
    return tb, Fc


def lens_forward(e_real, e_imag, phase_real, phase_imag, *, force_pallas=False):
    """E (B,N,N) complex as real/imag float32; phase (N,N) with amplitude folded in."""
    B, N, _ = e_real.shape
    F = N * N

    if not force_pallas and B * F < _PALLAS_MIN_ELEMS:
        # Tiny problem: launch overhead dominates a custom call; let XLA fuse.
        pr = phase_real.reshape(1, N, N)
        pi = phase_imag.reshape(1, N, N)
        return (e_real * pr - e_imag * pi, e_real * pi + e_imag * pr)

    # Lane-dense flattened field, padded to a multiple of 128 lanes.
    F_pad = ((F + _LANE - 1) // _LANE) * _LANE
    er = e_real.reshape(B, F)
    ei = e_imag.reshape(B, F)
    pr = phase_real.reshape(1, F)
    pi = phase_imag.reshape(1, F)
    if F_pad != F:
        pad = ((0, 0), (0, F_pad - F))
        er = jnp.pad(er, pad)
        ei = jnp.pad(ei, pad)
        pr = jnp.pad(pr, pad)
        pi = jnp.pad(pi, pad)

    TB, Fc = _pick_tiles(B, F_pad)
    grid = (pl.cdiv(B, TB), pl.cdiv(F_pad, Fc))

    e_spec = pl.BlockSpec((TB, Fc), lambda b, f: (b, f))
    p_spec = pl.BlockSpec((1, Fc), lambda b, f: (0, f))

    # 4 big double-buffered streams (er, ei, out_r, out_i) + 2 phase streams.
    tile_bytes = TB * Fc * 4
    vmem_bytes = 2 * (4 * tile_bytes + 2 * Fc * 4)
    vmem_limit = int(min(max(int(vmem_bytes * 1.5) + (1 << 20), 16 << 20),
                         48 << 20))

    out_r, out_i = pl.pallas_call(
        _lens_kernel,
        out_shape=(
            jax.ShapeDtypeStruct((B, F_pad), jnp.float32),
            jax.ShapeDtypeStruct((B, F_pad), jnp.float32),
        ),
        grid_spec=pltpu.PrefetchScalarGridSpec(
            num_scalar_prefetch=0,
            grid=grid,
            in_specs=[e_spec, e_spec, p_spec, p_spec],
            out_specs=[e_spec, e_spec],
        ),
        compiler_params=pltpu.CompilerParams(
            dimension_semantics=("parallel", "parallel"),
            vmem_limit_bytes=vmem_limit,
        ),
    )(er, ei, pr, pi)

    if F_pad != F:
        out_r = out_r[:, :F]
        out_i = out_i[:, :F]
    return out_r.reshape(B, N, N), out_i.reshape(B, N, N)


def make_lens_buffers(focus, wl=5.32e-07, N_pixels=16, pixel_size=2e-05):
    """Deterministic parameter setup mirroring Lens.__init__ (plain numpy glue).

    The all-ones amplitude buffer is folded into the phase (exactly equivalent
    since amplitude is real), so the kernel only needs two (N,N) phase planes.
    Integer arange scaled by pixel_size gives exactly N points (float-step
    np.arange can yield N±1).  Matches the even-N PyTorch reference; odd N
    centering would need re-verification (original module uses N=400).
    """
    mesh = (np.arange(N_pixels) - N_pixels // 2) * pixel_size
    x, y = np.meshgrid(mesh, mesh)
    angle = -np.pi / (wl * 2.0 * focus) * (x ** 2 + y ** 2)
    amplitude = np.ones((N_pixels, N_pixels), dtype=np.float32)
    phase_real = jnp.asarray(np.cos(angle) * amplitude, dtype=jnp.float32)
    phase_imag = jnp.asarray(np.sin(angle) * amplitude, dtype=jnp.float32)
    return phase_real, phase_imag


if __name__ == "__main__":
    B, N = 2, 16
    focus = 0.1

    phase_r, phase_i = make_lens_buffers(focus, N_pixels=N)

    key = jax.random.PRNGKey(0)
    kr, ki = jax.random.split(key)
    e_real = jax.random.normal(kr, (B, N, N), dtype=jnp.float32)
    e_imag = jax.random.normal(ki, (B, N, N), dtype=jnp.float32)

    # force_pallas=True so the Pallas kernel itself is exercised even at this
    # tiny demo size (production callers get the XLA fast path automatically).
    out_r, out_i = lens_forward(e_real, e_imag, phase_r, phase_i,
                                force_pallas=True)
    jax.block_until_ready((out_r, out_i))

    # Reference check against plain-JAX complex math (same semantics as torch:
    # E * amplitude * phase, amplitude == ones).
    E = e_real + 1j * e_imag
    amplitude = jnp.ones((N, N), dtype=jnp.float32)
    P = phase_r + 1j * phase_i
    ref = E * amplitude * P
    np.testing.assert_allclose(np.asarray(out_r), np.asarray(ref.real),
                               rtol=1e-5, atol=1e-5)
    np.testing.assert_allclose(np.asarray(out_i), np.asarray(ref.imag),
                               rtol=1e-5, atol=1e-5)

    print("KERNEL_OK")
</pallas_src>

<mosaic_0001>
module attributes {stable_mosaic.version = 11 : i64} {
  func.func @_lens_kernel(%arg0: i32, %arg1: i32, %arg2: memref<2x256xf32, #tpu.memory_space<vmem>>, %arg3: memref<2x256xf32, #tpu.memory_space<vmem>>, %arg4: memref<1x256xf32, #tpu.memory_space<vmem>>, %arg5: memref<1x256xf32, #tpu.memory_space<vmem>>, %arg6: memref<2x256xf32, #tpu.memory_space<vmem>>, %arg7: memref<2x256xf32, #tpu.memory_space<vmem>>) attributes {dimension_semantics = [#tpu.dimension_semantics<parallel>, #tpu.dimension_semantics<parallel>], iteration_bounds = array<i64: 1, 1>, scalar_prefetch = 0 : i64, scratch_operands = 0 : i64, tpu.core_type = #tpu.core_type<tc>, window_params = [{transform_indices = @transform_0, window_bounds = array<i64: 2, 256>}, {transform_indices = @transform_1, window_bounds = array<i64: 2, 256>}, {transform_indices = @transform_2, window_bounds = array<i64: 1, 256>}, {transform_indices = @transform_3, window_bounds = array<i64: 1, 256>}, {transform_indices = @transform_4, window_bounds = array<i64: 2, 256>}, {transform_indices = @transform_5, window_bounds = array<i64: 2, 256>}]} {
    %c0 = arith.constant 0 : index
    %c0_0 = arith.constant 0 : index
    %0 = vector.load %arg2[%c0, %c0_0] : memref<2x256xf32, #tpu.memory_space<vmem>>, vector<2x256xf32>
    %c0_1 = arith.constant 0 : index
    %c0_2 = arith.constant 0 : index
    %1 = vector.load %arg3[%c0_1, %c0_2] : memref<2x256xf32, #tpu.memory_space<vmem>>, vector<2x256xf32>
    %c0_3 = arith.constant 0 : index
    %c0_4 = arith.constant 0 : index
    %2 = vector.load %arg4[%c0_3, %c0_4] : memref<1x256xf32, #tpu.memory_space<vmem>>, vector<1x256xf32>
    %c0_5 = arith.constant 0 : index
    %c0_6 = arith.constant 0 : index
    %3 = vector.load %arg5[%c0_5, %c0_6] : memref<1x256xf32, #tpu.memory_space<vmem>>, vector<1x256xf32>
    %4 = vector.broadcast %2 : vector<1x256xf32> to vector<2x256xf32>
    %5 = arith.mulf %0, %4 : vector<2x256xf32>
    %6 = vector.broadcast %3 : vector<1x256xf32> to vector<2x256xf32>
    %7 = arith.mulf %1, %6 : vector<2x256xf32>
    %8 = arith.subf %5, %7 : vector<2x256xf32>
    %c0_7 = arith.constant 0 : index
    %c0_8 = arith.constant 0 : index
    %9 = vector.load %arg6[%c0_7, %c0_8] : memref<2x256xf32, #tpu.memory_space<vmem>>, vector<2x256xf32>
    tpu.vector_store %arg6[%c0_7, %c0_8], %8 {strides = array<i32>} : memref<2x256xf32, #tpu.memory_space<vmem>>, vector<2x256xf32>,
    %10 = vector.broadcast %3 : vector<1x256xf32> to vector<2x256xf32>
    %11 = arith.mulf %0, %10 : vector<2x256xf32>
    %12 = vector.broadcast %2 : vector<1x256xf32> to vector<2x256xf32>
    %13 = arith.mulf %1, %12 : vector<2x256xf32>
    %14 = arith.addf %11, %13 : vector<2x256xf32>
    %c0_9 = arith.constant 0 : index
    %c0_10 = arith.constant 0 : index
    %15 = vector.load %arg7[%c0_9, %c0_10] : memref<2x256xf32, #tpu.memory_space<vmem>>, vector<2x256xf32>
    tpu.vector_store %arg7[%c0_9, %c0_10], %14 {strides = array<i32>} : memref<2x256xf32, #tpu.memory_space<vmem>>, vector<2x256xf32>,
    return
  }
  func.func @transform_0(%arg0: i32, %arg1: i32) -> (i32, i32) {
    %c0_i32 = arith.constant 0 : i32
    return %arg0, %arg1 : i32, i32
  }
  func.func @transform_1(%arg0: i32, %arg1: i32) -> (i32, i32) {
    %c0_i32 = arith.constant 0 : i32
    return %arg0, %arg1 : i32, i32
  }
  func.func @transform_2(%arg0: i32, %arg1: i32) -> (i32, i32) {
    %c0_i32 = arith.constant 0 : i32
    %c0_i32_0 = arith.constant 0 : i32
    return %c0_i32, %arg1 : i32, i32
  }
  func.func @transform_3(%arg0: i32, %arg1: i32) -> (i32, i32) {
    %c0_i32 = arith.constant 0 : i32
    %c0_i32_0 = arith.constant 0 : i32
    return %c0_i32, %arg1 : i32, i32
  }
  func.func @transform_4(%arg0: i32, %arg1: i32) -> (i32, i32) {
    %c0_i32 = arith.constant 0 : i32
    return %arg0, %arg1 : i32, i32
  }
  func.func @transform_5(%arg0: i32, %arg1: i32) -> (i32, i32) {
    %c0_i32 = arith.constant 0 : i32
    return %arg0, %arg1 : i32, i32
  }
}

</mosaic_0001>

<llo_original>
// kernel: tpu_custom_call.1
$region0: #{tpu_custom_call.1}
  #allocation0 [shape = 'u32[]', space=smem, size = 0x4, offset = 0x4, fixed_abs, tag = 'smem constant byte address 0x4 - core index']
  #allocation1 [shape = 'u32[72,128]{1,0:T(1,128)}', space=vmem, size = 0x9000, scoped, tag = 'internal scratch']
  %s0 = inlined_call_operand.hbm [shape: f32[2,256], index: 0, kind: input, shape index: {}]
  %s1 = inlined_call_operand.hbm [shape: f32[2,256], index: 1, kind: input, shape index: {}]
  %s2 = inlined_call_operand.hbm [shape: f32[1,256], index: 2, kind: input, shape index: {}]
  %s3 = inlined_call_operand.vmem [shape: f32[1,256], index: 3, kind: input, shape index: {}]
  %s4 = inlined_call_operand.hbm [shape: f32[2,256], index: 4, kind: output, shape index: {0}]
  %s5 = inlined_call_operand.hbm [shape: f32[2,256], index: 5, kind: output, shape index: {1}]
  %6 = xla_tuple %s4, %s5
  %s7 = sld [smem:[#allocation0]]
  $region46: #{tpu_custom_call.1} parent=0
    _
  %s9 = ssub.s32 1, %s7
  %s10 = scalar_select 0, %s9, %s7
  $region1: #{tpu_custom_call.1} parent=0
    #allocation2 [shape = 'u8[2048]{0}', space=vmem, size = 0x800, scoped, tag = 'input window, operand 0, single buffered']
    #allocation3 [shape = 's32[1]{0}', space=sflag, size = 0x4, scoped, tag = 'scoped memory for tpu_custom_call.1']
    #allocation4 [shape = 's32[1]{0}', space=sflag, size = 0x4, scoped, tag = 'scoped memory for tpu_custom_call.1']
    #allocation5 [shape = 'u8[2048]{0}', space=vmem, size = 0x800, scoped, tag = 'input window, operand 1, single buffered']
    #allocation6 [shape = 's32[1]{0}', space=sflag, size = 0x4, scoped, tag = 'scoped memory for tpu_custom_call.1']
    #allocation7 [shape = 'u8[1024]{0}', space=vmem, size = 0x400, scoped, tag = 'input window, operand 2, single buffered']
    #allocation8 [shape = 'u8[2048]{0}', space=vmem, size = 0x800, scoped, tag = 'output window, operand 0, single buffered']
    #allocation9 [shape = 'u8[2048]{0}', space=vmem, size = 0x800, scoped, tag = 'output window, operand 1, single buffered']
    #allocation10 [shape = 's32[1]{0}', space=sflag, size = 0x4, scoped, tag = 'scoped memory for tpu_custom_call.1']
    %11 = vsyncpa [#allocation3], 0
    %12 = vsyncpa [#allocation6], 0
    %13 = vsyncpa [#allocation4], 0
    %14 = vsyncpa [#allocation10], 0
    // Predicated region
    $region2: #{tpu_custom_call.1} parent=1 // pred_check
      _
    $region3: #{tpu_custom_call.1} parent=1 // pred_check_branch
      %16 = sbr.rel (0) target = $region5
    $region4: #{tpu_custom_call.1} parent=1 // pred_region
      %18 = vsyncadd [#allocation3], 0
      %s20 = sshll.u32 %s0, 4
      %s21 = int_to_ptr.hbm [resolvable:$true] %s20
      %s22 = sshll.u32 [#allocation2], 4
      %s23 = int_to_ptr.vmem [resolvable:$true] %s22
      %25 = dma.hbm_to_vmem [thread:$0]  %s21, 64, %s23, [#allocation3]
    $region5: #{tpu_custom_call.1} parent=1 // pred_fallthru
      _
    // Predicated region
    $region6: #{tpu_custom_call.1} parent=1 // pred_check
      _
    $region7: #{tpu_custom_call.1} parent=1 // pred_check_branch
      %27 = sbr.rel (0) target = $region9
    $region8: #{tpu_custom_call.1} parent=1 // pred_region
      %29 = vsyncadd [#allocation6], 0
      %s31 = sshll.u32 %s1, 4
      %s32 = int_to_ptr.hbm [resolvable:$true] %s31
      %s33 = sshll.u32 [#allocation5], 4
      %s34 = int_to_ptr.vmem [resolvable:$true] %s33
      %36 = dma.hbm_to_vmem [thread:$0]  %s32, 64, %s34, [#allocation6]
    $region9: #{tpu_custom_call.1} parent=1 // pred_fallthru
      _
    // Predicated region
    $region10: #{tpu_custom_call.1} parent=1 // pred_check
      _
    $region11: #{tpu_custom_call.1} parent=1 // pred_check_branch
      %38 = sbr.rel (0) target = $region13
    $region12: #{tpu_custom_call.1} parent=1 // pred_region
      %40 = vsyncadd [#allocation6], 0
      %s42 = sshll.u32 %s2, 4
      %s43 = int_to_ptr.hbm [resolvable:$true] %s42
      %s44 = sshll.u32 [#allocation7], 4
      %s45 = int_to_ptr.vmem [resolvable:$true] %s44
      %47 = dma.hbm_to_vmem [thread:$0]  %s43, 32, %s45, [#allocation6]
    $region13: #{tpu_custom_call.1} parent=1 // pred_fallthru
      _
    // Predicated region
    $region14: #{tpu_custom_call.1} parent=1 // pred_check
      _
    $region15: #{tpu_custom_call.1} parent=1 // pred_check_branch
      %49 = sbr.rel (0) target = $region17
    $region16: #{tpu_custom_call.1} parent=1 // pred_region
      _
    $region17: #{tpu_custom_call.1} parent=1 // pred_fallthru
      _
    // Predicated region
    $region18: #{tpu_custom_call.1} parent=1 // pred_check
      _
    $region19: #{tpu_custom_call.1} parent=1 // pred_check_branch
      %51 = sbr.rel (0) target = $region21
    $region20: #{tpu_custom_call.1} parent=1 // pred_region
      %53 = dma.done [#allocation3], 64
    $region21: #{tpu_custom_call.1} parent=1 // pred_fallthru
      _
    // Predicated region
    $region22: #{tpu_custom_call.1} parent=1 // pred_check
      _
    $region23: #{tpu_custom_call.1} parent=1 // pred_check_branch
      %55 = sbr.rel (0) target = $region25
    $region24: #{tpu_custom_call.1} parent=1 // pred_region
      %57 = dma.done [#allocation6], 64
    $region25: #{tpu_custom_call.1} parent=1 // pred_fallthru
      _
    // Predicated region
    $region26: #{tpu_custom_call.1} parent=1 // pred_check
      _
    $region27: #{tpu_custom_call.1} parent=1 // pred_check_branch
      %59 = sbr.rel (0) target = $region29
    $region28: #{tpu_custom_call.1} parent=1 // pred_region
      %61 = dma.done [#allocation6], 32
    $region29: #{tpu_custom_call.1} parent=1 // pred_fallthru
      _
    %v62 = vld [vmem:[#allocation2] sm:$0xf]
    %v63 = vld [vmem:[#allocation5] sm:$0xf]
    %v64 = vld [vmem:[#allocation7] sm:$0x3]
    %v65 = vld [vmem:[%s3] sm:$0x3]
    %v67 = vperm.slane %v64, 0
    %v68 = vperm.slane %v64, 1
    %v69 = vrot.slane %v68, 6
    %vm70 = vcmask 1041408
    %v71 = vsel %vm70, %v67, %v69
    %v73 = vmul.f32 %v62, %v71
    %v75 = vperm.slane %v65, 0
    %v76 = vperm.slane %v65, 1
    %v77 = vrot.slane %v76, 6
    %v78 = vsel %vm70, %v75, %v77
    %v80 = vmul.f32 %v63, %v78
    %v81 = vsub.f32 %v73, %v80
    %82 = vst [vmem:[#allocation8] sm:$0xf] %v81
    %v83 = vmul.f32 %v62, %v78
    %v84 = vmul.f32 %v63, %v71
    %v85 = vadd.f32 %v83, %v84
    %86 = vst [vmem:[#allocation9] sm:$0xf] %v85
    // Predicated region
    $region30: #{tpu_custom_call.1} parent=1 // pred_check
      _
    $region31: #{tpu_custom_call.1} parent=1 // pred_check_branch
      %88 = sbr.rel (0) target = $region33
    $region32: #{tpu_custom_call.1} parent=1 // pred_region
      %90 = vsyncadd [#allocation4], 0
      %s92 = sshll.u32 [#allocation8], 4
      %s93 = int_to_ptr.vmem [resolvable:$true] %s92
      %s94 = sshll.u32 %s4, 4
      %s95 = int_to_ptr.hbm [resolvable:$true] %s94
      %97 = dma.vmem_to_hbm [thread:$0]  %s93, 64, %s95, [#allocation4]
    $region33: #{tpu_custom_call.1} parent=1 // pred_fallthru
      _
    // Predicated region
    $region34: #{tpu_custom_call.1} parent=1 // pred_check
      _
    $region35: #{tpu_custom_call.1} parent=1 // pred_check_branch
      %99 = sbr.rel (0) target = $region37
    $region36: #{tpu_custom_call.1} parent=1 // pred_region
      %101 = vsyncadd [#allocation10], 0
      %s103 = sshll.u32 [#allocation9], 4
      %s104 = int_to_ptr.vmem [resolvable:$true] %s103
      %s105 = sshll.u32 %s5, 4
      %s106 = int_to_ptr.hbm [resolvable:$true] %s105
      %108 = dma.vmem_to_hbm [thread:$0]  %s104, 64, %s106, [#allocation10]
    $region37: #{tpu_custom_call.1} parent=1 // pred_fallthru
      _
    // Predicated region
    $region38: #{tpu_custom_call.1} parent=1 // pred_check
      _
    $region39: #{tpu_custom_call.1} parent=1 // pred_check_branch
      %110 = sbr.rel (0) target = $region41
    $region40: #{tpu_custom_call.1} parent=1 // pred_region
      %112 = dma.done [#allocation4], 64
    $region41: #{tpu_custom_call.1} parent=1 // pred_fallthru
      _
    // Predicated region
    $region42: #{tpu_custom_call.1} parent=1 // pred_check
      _
    $region43: #{tpu_custom_call.1} parent=1 // pred_check_branch
      %114 = sbr.rel (0) target = $region45
    $region44: #{tpu_custom_call.1} parent=1 // pred_region
      %116 = dma.done [#allocation10], 64
    $region45: #{tpu_custom_call.1} parent=1 // pred_fallthru
      _
    %117 = vsyncpa [#allocation3], 1
    %118 = vsyncpa [#allocation6], 1
    %119 = vsyncpa [#allocation4], 1
    %120 = vsyncpa [#allocation10], 1

</llo_original>
